<compile_context>
chip_gen: v7x
topology: tpu7x:2x2x1
jax: 0.10.0
libtpu: 0.0.40
codegen_flags: <defaults>
</compile_context>

<pallas_src>
import numpy as np
import jax
import jax.numpy as jnp
from jax.experimental import pallas as pl
from jax.experimental.pallas import tpu as pltpu

# ---------------- model hyper-params (small, cfg-scaled) ----------------
B = 2                # batch
C_IN = 4             # cfg.ch
H = W = 16           # input spatial size
C_STEM = 32          # stem output channels
NUM_FEATURES = 64    # backbone num_features
NUM_CLASSES = 4      # cfg.num_classes
FREQ_DIV_N = 5
N_HEAD2 = 500 // FREQ_DIV_N - 40 // FREQ_DIV_N + 1   # = 93
N_HEAD3 = 1
N_HEADS = NUM_CLASSES + N_HEAD2 + N_HEAD3            # = 98
N_PAD = 128                                          # lane-dense merged head width

KH = KW = 3
STRIDE = 2
PAD = 1
HP = H + 2 * PAD                                      # 18 (padded height)
WP = W + 2 * PAD                                      # 18 (padded width)
HO = WO = (H + 2 * PAD - KH) // STRIDE + 1            # = 8


# ---------------- single fused Pallas kernel ----------------
def _fused_forward_kernel(x_ref, l_ref, wstem_ref, pwb_ref, pr_ref, pc_ref,
                          hw_ref, hb_ref, out_ref):
    """Whole forward pass in one kernel; everything VMEM/vreg resident, all matmuls bf16->f32.

    x_ref:     (B*HP, WP*C_IN) = (36, 72)  bf16  zero-padded NHWC input, flattened
    l_ref:     (KH, B*HO, B*HP)            bf16  0/1 stride-2 row-selection per kernel-row tap
    wstem_ref: (KH, WP*C_IN, WO*C_STEM)    bf16  structured stem weights per kernel-row tap
    pwb_ref:   (WO*C_STEM, WO*NF)          bf16  block-diagonal 1x1 projection weights
    pr_ref:    (B, B*HO)                   bf16  mean-over-ho pooling matrix
    pc_ref:    (WO*NF, NF)                 bf16  mean-over-wo pooling matrix
    hw_ref:    (NF, N_PAD)                 bf16  merged [head1 | head2 | head3 | 0-pad] weights
    hb_ref:    (1, N_PAD)                  f32   merged biases
    out_ref:   (B, N_PAD)                  f32   lane-dense packed head outputs
    """
    x2 = x_ref[...]                                                   # (36, 72) bf16

    # ---- 3x3 stride-2 stem conv: 3 tap-row structured matmuls (all MXU) + ReLU ----
    z = jnp.zeros((B * HO, WO * C_STEM), jnp.float32)
    for i in range(KH):
        # stride-2 row selection for kernel-row tap i (exact: 0/1 matrix, one 1 per row)
        y_i = jnp.dot(l_ref[i], x2, preferred_element_type=jnp.float32)
        y_i = y_i.astype(jnp.bfloat16)                                # (16, 72)
        # structured weights fold kernel-col taps j, input channels c, stride-2 col select
        z = z + jnp.dot(y_i, wstem_ref[i], preferred_element_type=jnp.float32)
    z = jnp.maximum(z, 0.0).astype(jnp.bfloat16)                      # (16, 256) rows=(b,ho) cols=(wo,co)

    # ---- 1x1 feature projection (block-diagonal over wo) + ReLU ----
    f = jnp.dot(z, pwb_ref[...], preferred_element_type=jnp.float32)
    f = jnp.maximum(f, 0.0).astype(jnp.bfloat16)                      # (16, 512) cols=(wo,nf)

    # ---- global average pool: both reductions ride the MXU ----
    g = jnp.dot(pr_ref[...], f, preferred_element_type=jnp.float32)   # (B, 512)   mean over ho
    feat = jnp.dot(g.astype(jnp.bfloat16), pc_ref[...],
                   preferred_element_type=jnp.float32)                # (B, NF)    mean over wo

    # ---- merged lane-dense heads: one bf16 matmul + f32 bias ----
    y = jnp.dot(feat.astype(jnp.bfloat16), hw_ref[...],
                preferred_element_type=jnp.float32) + hb_ref[...]     # (B, 128)
    out_ref[...] = y.astype(out_ref.dtype)


def fused_forward_call(x2, L, wstem, pwb, pr, pc, head_w, head_b):
    vmem = pl.BlockSpec(memory_space=pltpu.MemorySpace.VMEM)
    return pl.pallas_call(
        _fused_forward_kernel,
        out_shape=jax.ShapeDtypeStruct((B, N_PAD), jnp.float32),
        in_specs=[vmem] * 8,
        out_specs=vmem,
    )(x2, L, wstem, pwb, pr, pc, head_w, head_b)


# ---------------- parameters ----------------
def init_params(key):
    ks = jax.random.split(key, 8)

    def u(k, shape, fan_in):
        bound = 1.0 / (fan_in ** 0.5)
        return jax.random.uniform(k, shape, jnp.float32, -bound, bound)

    return {
        "stem_w": u(ks[0], (C_STEM, C_IN, KH, KW), C_IN * KH * KW),
        "proj_w": u(ks[1], (NUM_FEATURES, C_STEM, 1, 1), C_STEM),
        "h1_w":   u(ks[2], (NUM_CLASSES, NUM_FEATURES), NUM_FEATURES),
        "h1_b":   u(ks[3], (NUM_CLASSES,), NUM_FEATURES),
        "h2_w":   u(ks[4], (N_HEAD2, NUM_FEATURES), NUM_FEATURES),
        "h2_b":   u(ks[5], (N_HEAD2,), NUM_FEATURES),
        "h3_w":   u(ks[6], (N_HEAD3, NUM_FEATURES), NUM_FEATURES),
        "h3_b":   u(ks[7], (N_HEAD3,), NUM_FEATURES),
    }


def prepare_inference_params(params):
    """One-time layout plumbing (host-side, outside jit): build the constant structured
    matrices so that the *entire* forward pass is a chain of small MXU matmuls in one kernel."""
    stem_w = np.asarray(params["stem_w"], np.float32)            # (C_STEM, C_IN, KH, KW) = (co,c,i,j)
    proj_w = np.asarray(params["proj_w"], np.float32)[:, :, 0, 0]  # (NF, C_STEM)

    # L[i]: 0/1 stride-2 row-selection for kernel-row tap i: picks padded row b*HP + 2*ho + i.
    L = np.zeros((KH, B * HO, B * HP), np.float32)
    for i in range(KH):
        for b in range(B):
            for ho in range(HO):
                L[i, b * HO + ho, b * HP + STRIDE * ho + i] = 1.0

    # wstem[i]: structured stem weights; column block wo gets w[:, :, i, j].T at rows of
    # padded column wp = 2*wo + j (folds kernel-col tap, channel, and stride-2 col select).
    wstem = np.zeros((KH, WP * C_IN, WO * C_STEM), np.float32)
    for i in range(KH):
        for j in range(KW):
            for wo in range(WO):
                wp = STRIDE * wo + j
                wstem[i, wp * C_IN:(wp + 1) * C_IN,
                      wo * C_STEM:(wo + 1) * C_STEM] = stem_w[:, :, i, j].T

    # Block-diagonal 1x1 projection: one (C_STEM, NF) block per output column wo.
    pwb = np.kron(np.eye(WO, dtype=np.float32), proj_w.T)        # (256, 512)

    # GAP pooling matrices (means ride the MXU, exact 1/8 values in bf16).
    pr = np.kron(np.eye(B, dtype=np.float32), np.ones((1, HO), np.float32)) / HO     # (B, B*HO)
    pc = np.kron(np.ones((WO, 1), np.float32), np.eye(NUM_FEATURES, dtype=np.float32)) / WO  # (512, NF)

    # Merged lane-dense heads (zero-padded 98 -> 128; padded columns stay exactly zero).
    head_w = np.concatenate([np.asarray(params["h1_w"], np.float32).T,
                             np.asarray(params["h2_w"], np.float32).T,
                             np.asarray(params["h3_w"], np.float32).T], axis=1)       # (NF, 98)
    head_w = np.pad(head_w, ((0, 0), (0, N_PAD - N_HEADS)))
    head_b = np.concatenate([np.asarray(params["h1_b"], np.float32),
                             np.asarray(params["h2_b"], np.float32),
                             np.asarray(params["h3_b"], np.float32)])
    head_b = np.pad(head_b, (0, N_PAD - N_HEADS)).reshape(1, N_PAD)

    bf = jnp.bfloat16
    return {
        "L": jnp.asarray(L, bf),
        "wstem": jnp.asarray(wstem, bf),
        "pwb": jnp.asarray(pwb, bf),
        "pr": jnp.asarray(pr, bf),
        "pc": jnp.asarray(pc, bf),
        "head_w": jnp.asarray(head_w, bf),
        "head_b": jnp.asarray(head_b, jnp.float32),
    }


# ---------------- forward ----------------
def forward(x_nchw, pp):
    # Minimal XLA glue: NCHW->NHWC, spatial zero-pad, flatten, bf16 cast (one tiny fusion,
    # ~5 KiB to the kernel).  All patch extraction / conv / pool / heads run in the kernel.
    x = jnp.transpose(x_nchw, (0, 2, 3, 1))
    xp = jnp.pad(x, ((0, 0), (PAD, PAD), (PAD, PAD), (0, 0)))
    x2 = xp.reshape(B * HP, WP * C_IN).astype(jnp.bfloat16)

    y = fused_forward_call(x2, pp["L"], pp["wstem"], pp["pwb"], pp["pr"], pp["pc"],
                           pp["head_w"], pp["head_b"])

    y1 = y[:, :NUM_CLASSES]                                   # (B, num_classes)
    y2 = y[:, NUM_CLASSES:NUM_CLASSES + N_HEAD2]              # (B, 93)
    y3 = y[:, NUM_CLASSES + N_HEAD2]                          # (B,)
    return y1[:, 0], y2, y3                                   # == (y1[:,0], y2, y3[:,0])


# ---------------- f32 pure-JAX reference of the same stand-in backbone ----------------
def reference_forward(x_nchw, params):
    x = jnp.transpose(x_nchw, (0, 2, 3, 1)).astype(jnp.float32)          # NHWC
    w = jnp.transpose(params["stem_w"], (2, 3, 1, 0))                    # HWIO
    z = jax.lax.conv_general_dilated(x, w, (STRIDE, STRIDE),
                                     ((PAD, PAD), (PAD, PAD)),
                                     dimension_numbers=("NHWC", "HWIO", "NHWC"))
    z = jnp.maximum(z, 0.0)
    pw = params["proj_w"][:, :, 0, 0]                                    # (NF, C_STEM)
    f = jnp.maximum(jnp.einsum("bhwc,fc->bhwf", z, pw), 0.0)
    feat = jnp.mean(f, axis=(1, 2))                                      # (B, NF)
    y1 = feat @ params["h1_w"].T + params["h1_b"]
    y2 = feat @ params["h2_w"].T + params["h2_b"]
    y3 = feat @ params["h3_w"].T + params["h3_b"]
    return y1[:, 0], y2, y3[:, 0]


if __name__ == "__main__":
    key = jax.random.PRNGKey(0)
    k_x, k_p = jax.random.split(key)
    x = jax.random.normal(k_x, (B, C_IN, H, W), dtype=jnp.float32)
    params = init_params(k_p)
    pp = prepare_inference_params(params)

    fwd = jax.jit(forward)
    y1, y2, y3 = fwd(x, pp)
    jax.block_until_ready((y1, y2, y3))

    assert y1.shape == (B,), y1.shape
    assert y2.shape == (B, N_HEAD2), y2.shape
    assert y3.shape == (B,), y3.shape

    # Light correctness check vs f32 reference (bf16-matmul tolerance).
    r1, r2, r3 = jax.jit(reference_forward)(x, params)
    jax.block_until_ready((r1, r2, r3))
    np.testing.assert_allclose(np.asarray(y1), np.asarray(r1), rtol=5e-2, atol=8e-2)
    np.testing.assert_allclose(np.asarray(y2), np.asarray(r2), rtol=5e-2, atol=8e-2)
    np.testing.assert_allclose(np.asarray(y3), np.asarray(r3), rtol=5e-2, atol=8e-2)

    print("KERNEL_OK")
</pallas_src>

<mosaic_0001>
module attributes {stable_mosaic.version = 11 : i64} {
  func.func @_fused_forward_kernel(%arg0: memref<36x72xbf16, #tpu.memory_space<vmem>>, %arg1: memref<3x16x36xbf16, #tpu.memory_space<vmem>>, %arg2: memref<3x72x256xbf16, #tpu.memory_space<vmem>>, %arg3: memref<256x512xbf16, #tpu.memory_space<vmem>>, %arg4: memref<2x16xbf16, #tpu.memory_space<vmem>>, %arg5: memref<512x64xbf16, #tpu.memory_space<vmem>>, %arg6: memref<64x128xbf16, #tpu.memory_space<vmem>>, %arg7: memref<1x128xf32, #tpu.memory_space<vmem>>, %arg8: memref<2x128xf32, #tpu.memory_space<vmem>>) attributes {dimension_semantics = [], scalar_prefetch = 0 : i64, scratch_operands = 0 : i64, tpu.core_type = #tpu.core_type<tc>} {
    %c0 = arith.constant 0 : index
    %c0_0 = arith.constant 0 : index
    %0 = vector.load %arg0[%c0, %c0_0] : memref<36x72xbf16, #tpu.memory_space<vmem>>, vector<36x72xbf16>
    %cst = arith.constant 0.000000e+00 : f32
    %1 = vector.broadcast %cst : f32 to vector<16x256xf32>
    %c0_1 = arith.constant 0 : index
    %c0_2 = arith.constant 0 : index
    %c0_3 = arith.constant 0 : index
    %2 = vector.load %arg1[%c0_1, %c0_2, %c0_3] : memref<3x16x36xbf16, #tpu.memory_space<vmem>>, vector<1x16x36xbf16>
    %3 = vector.shape_cast %2 : vector<1x16x36xbf16> to vector<16x36xbf16>
    %cst_4 = arith.constant dense<0.000000e+00> : vector<16x72xf32>
    %4 = tpu.matmul %3, %0, %cst_4 {dimension_numbers = #tpu.dot_dimension_numbers<[1], [0], [0], [1], [0, 0, 1, 1], [], []>} : vector<16x36xbf16>, vector<36x72xbf16>, vector<16x72xf32> -> vector<16x72xf32>
    %5 = arith.truncf %4 : vector<16x72xf32> to vector<16x72xbf16>
    %c0_5 = arith.constant 0 : index
    %c0_6 = arith.constant 0 : index
    %c0_7 = arith.constant 0 : index
    %6 = vector.load %arg2[%c0_5, %c0_6, %c0_7] : memref<3x72x256xbf16, #tpu.memory_space<vmem>>, vector<1x72x256xbf16>
    %7 = vector.shape_cast %6 : vector<1x72x256xbf16> to vector<72x256xbf16>
    %cst_8 = arith.constant dense<0.000000e+00> : vector<16x256xf32>
    %8 = tpu.matmul %5, %7, %cst_8 {dimension_numbers = #tpu.dot_dimension_numbers<[1], [0], [0], [1], [0, 0, 1, 1], [], []>} : vector<16x72xbf16>, vector<72x256xbf16>, vector<16x256xf32> -> vector<16x256xf32>
    %9 = arith.addf %1, %8 : vector<16x256xf32>
    %c1 = arith.constant 1 : index
    %c0_9 = arith.constant 0 : index
    %c0_10 = arith.constant 0 : index
    %10 = vector.load %arg1[%c1, %c0_9, %c0_10] : memref<3x16x36xbf16, #tpu.memory_space<vmem>>, vector<1x16x36xbf16>
    %11 = vector.shape_cast %10 : vector<1x16x36xbf16> to vector<16x36xbf16>
    %cst_11 = arith.constant dense<0.000000e+00> : vector<16x72xf32>
    %12 = tpu.matmul %11, %0, %cst_11 {dimension_numbers = #tpu.dot_dimension_numbers<[1], [0], [0], [1], [0, 0, 1, 1], [], []>} : vector<16x36xbf16>, vector<36x72xbf16>, vector<16x72xf32> -> vector<16x72xf32>
    %13 = arith.truncf %12 : vector<16x72xf32> to vector<16x72xbf16>
    %c1_12 = arith.constant 1 : index
    %c0_13 = arith.constant 0 : index
    %c0_14 = arith.constant 0 : index
    %14 = vector.load %arg2[%c1_12, %c0_13, %c0_14] : memref<3x72x256xbf16, #tpu.memory_space<vmem>>, vector<1x72x256xbf16>
    %15 = vector.shape_cast %14 : vector<1x72x256xbf16> to vector<72x256xbf16>
    %cst_15 = arith.constant dense<0.000000e+00> : vector<16x256xf32>
    %16 = tpu.matmul %13, %15, %cst_15 {dimension_numbers = #tpu.dot_dimension_numbers<[1], [0], [0], [1], [0, 0, 1, 1], [], []>} : vector<16x72xbf16>, vector<72x256xbf16>, vector<16x256xf32> -> vector<16x256xf32>
    %17 = arith.addf %9, %16 : vector<16x256xf32>
    %c2 = arith.constant 2 : index
    %c0_16 = arith.constant 0 : index
    %c0_17 = arith.constant 0 : index
    %18 = vector.load %arg1[%c2, %c0_16, %c0_17] : memref<3x16x36xbf16, #tpu.memory_space<vmem>>, vector<1x16x36xbf16>
    %19 = vector.shape_cast %18 : vector<1x16x36xbf16> to vector<16x36xbf16>
    %cst_18 = arith.constant dense<0.000000e+00> : vector<16x72xf32>
    %20 = tpu.matmul %19, %0, %cst_18 {dimension_numbers = #tpu.dot_dimension_numbers<[1], [0], [0], [1], [0, 0, 1, 1], [], []>} : vector<16x36xbf16>, vector<36x72xbf16>, vector<16x72xf32> -> vector<16x72xf32>
    %21 = arith.truncf %20 : vector<16x72xf32> to vector<16x72xbf16>
    %c2_19 = arith.constant 2 : index
    %c0_20 = arith.constant 0 : index
    %c0_21 = arith.constant 0 : index
    %22 = vector.load %arg2[%c2_19, %c0_20, %c0_21] : memref<3x72x256xbf16, #tpu.memory_space<vmem>>, vector<1x72x256xbf16>
    %23 = vector.shape_cast %22 : vector<1x72x256xbf16> to vector<72x256xbf16>
    %cst_22 = arith.constant dense<0.000000e+00> : vector<16x256xf32>
    %24 = tpu.matmul %21, %23, %cst_22 {dimension_numbers = #tpu.dot_dimension_numbers<[1], [0], [0], [1], [0, 0, 1, 1], [], []>} : vector<16x72xbf16>, vector<72x256xbf16>, vector<16x256xf32> -> vector<16x256xf32>
    %25 = arith.addf %17, %24 : vector<16x256xf32>
    %cst_23 = arith.constant 0.000000e+00 : f32
    %26 = vector.broadcast %cst_23 : f32 to vector<16x256xf32>
    %27 = arith.maximumf %25, %26 : vector<16x256xf32>
    %28 = arith.truncf %27 : vector<16x256xf32> to vector<16x256xbf16>
    %c0_24 = arith.constant 0 : index
    %c0_25 = arith.constant 0 : index
    %29 = vector.load %arg3[%c0_24, %c0_25] : memref<256x512xbf16, #tpu.memory_space<vmem>>, vector<256x512xbf16>
    %cst_26 = arith.constant dense<0.000000e+00> : vector<16x512xf32>
    %30 = tpu.matmul %28, %29, %cst_26 {dimension_numbers = #tpu.dot_dimension_numbers<[1], [0], [0], [1], [0, 0, 1, 1], [], []>} : vector<16x256xbf16>, vector<256x512xbf16>, vector<16x512xf32> -> vector<16x512xf32>
    %cst_27 = arith.constant 0.000000e+00 : f32
    %31 = vector.broadcast %cst_27 : f32 to vector<16x512xf32>
    %32 = arith.maximumf %30, %31 : vector<16x512xf32>
    %33 = arith.truncf %32 : vector<16x512xf32> to vector<16x512xbf16>
    %c0_28 = arith.constant 0 : index
    %c0_29 = arith.constant 0 : index
    %34 = vector.load %arg4[%c0_28, %c0_29] : memref<2x16xbf16, #tpu.memory_space<vmem>>, vector<2x16xbf16>
    %cst_30 = arith.constant dense<0.000000e+00> : vector<2x512xf32>
    %35 = tpu.matmul %34, %33, %cst_30 {dimension_numbers = #tpu.dot_dimension_numbers<[1], [0], [0], [1], [0, 0, 1, 1], [], []>} : vector<2x16xbf16>, vector<16x512xbf16>, vector<2x512xf32> -> vector<2x512xf32>
    %36 = arith.truncf %35 : vector<2x512xf32> to vector<2x512xbf16>
    %c0_31 = arith.constant 0 : index
    %c0_32 = arith.constant 0 : index
    %37 = vector.load %arg5[%c0_31, %c0_32] : memref<512x64xbf16, #tpu.memory_space<vmem>>, vector<512x64xbf16>
    %cst_33 = arith.constant dense<0.000000e+00> : vector<2x64xf32>
    %38 = tpu.matmul %36, %37, %cst_33 {dimension_numbers = #tpu.dot_dimension_numbers<[1], [0], [0], [1], [0, 0, 1, 1], [], []>} : vector<2x512xbf16>, vector<512x64xbf16>, vector<2x64xf32> -> vector<2x64xf32>
    %39 = arith.truncf %38 : vector<2x64xf32> to vector<2x64xbf16>
    %c0_34 = arith.constant 0 : index
    %c0_35 = arith.constant 0 : index
    %40 = vector.load %arg6[%c0_34, %c0_35] : memref<64x128xbf16, #tpu.memory_space<vmem>>, vector<64x128xbf16>
    %cst_36 = arith.constant dense<0.000000e+00> : vector<2x128xf32>
    %41 = tpu.matmul %39, %40, %cst_36 {dimension_numbers = #tpu.dot_dimension_numbers<[1], [0], [0], [1], [0, 0, 1, 1], [], []>} : vector<2x64xbf16>, vector<64x128xbf16>, vector<2x128xf32> -> vector<2x128xf32>
    %c0_37 = arith.constant 0 : index
    %c0_38 = arith.constant 0 : index
    %42 = vector.load %arg7[%c0_37, %c0_38] : memref<1x128xf32, #tpu.memory_space<vmem>>, vector<1x128xf32>
    %43 = vector.broadcast %42 : vector<1x128xf32> to vector<2x128xf32>
    %44 = arith.addf %41, %43 : vector<2x128xf32>
    %c0_39 = arith.constant 0 : index
    %c0_40 = arith.constant 0 : index
    %45 = vector.load %arg8[%c0_39, %c0_40] : memref<2x128xf32, #tpu.memory_space<vmem>>, vector<2x128xf32>
    tpu.vector_store %arg8[%c0_39, %c0_40], %44 {strides = array<i32>} : memref<2x128xf32, #tpu.memory_space<vmem>>, vector<2x128xf32>,
    return
  }
}

</mosaic_0001>

<llo_original>
// kernel: forward.1
$region0: #{forward.1}
  #allocation0 [shape = 'u32[]', space=smem, size = 0x4, offset = 0x4, fixed_abs, tag = 'smem constant byte address 0x4 - core index']
  #allocation1 [shape = 'u32[144,128]{1,0:T(1,128)}', space=vmem, size = 0x12000, scoped, tag = 'internal scratch']
  %s0 = inlined_call_operand.vmem [shape: bf16[36,72], index: 0, kind: input, shape index: {}]
  %s1 = inlined_call_operand.vmem [shape: bf16[3,16,36], index: 1, kind: input, shape index: {}]
  %s2 = inlined_call_operand.vmem [shape: bf16[3,72,256], index: 2, kind: input, shape index: {}]
  %s3 = inlined_call_operand.vmem [shape: bf16[256,512], index: 3, kind: input, shape index: {}]
  %s4 = inlined_call_operand.vmem [shape: bf16[2,16], index: 4, kind: input, shape index: {}]
  %s5 = inlined_call_operand.vmem [shape: bf16[512,64], index: 5, kind: input, shape index: {}]
  %s6 = inlined_call_operand.vmem [shape: bf16[64,128], index: 6, kind: input, shape index: {}]
  %s7 = inlined_call_operand.vmem [shape: f32[1,128], index: 7, kind: input, shape index: {}]
  %s8 = inlined_call_operand.vmem [shape: f32[2,128], index: 8, kind: output, shape index: {}]
  %s9 = sld [smem:[#allocation0]]
  $region42: #{forward.1} parent=0
    _
  %s11 = ssub.s32 1, %s9
  %s12 = scalar_select 0, %s11, %s9
  // Predicated region
  $region2: #{forward.1} parent=0 // pred_check
    _
  $region3: #{forward.1} parent=0 // pred_check_branch
    %14 = sbr.rel (0) target = $region5
  $region4: #{forward.1} parent=0 // pred_region
    _
  $region5: #{forward.1} parent=0 // pred_fallthru
    _
  // Predicated region
  $region6: #{forward.1} parent=0 // pred_check
    _
  $region7: #{forward.1} parent=0 // pred_check_branch
    %16 = sbr.rel (0) target = $region9
  $region8: #{forward.1} parent=0 // pred_region
    _
  $region9: #{forward.1} parent=0 // pred_fallthru
    _
  // Predicated region
  $region10: #{forward.1} parent=0 // pred_check
    _
  $region11: #{forward.1} parent=0 // pred_check_branch
    %18 = sbr.rel (0) target = $region13
  $region12: #{forward.1} parent=0 // pred_region
    _
  $region13: #{forward.1} parent=0 // pred_fallthru
    _
  // Predicated region
  $region14: #{forward.1} parent=0 // pred_check
    _
  $region15: #{forward.1} parent=0 // pred_check_branch
    %20 = sbr.rel (0) target = $region17
  $region16: #{forward.1} parent=0 // pred_region
    _
  $region17: #{forward.1} parent=0 // pred_fallthru
    _
  // Predicated region
  $region18: #{forward.1} parent=0 // pred_check
    _
  $region19: #{forward.1} parent=0 // pred_check_branch
    %22 = sbr.rel (0) target = $region21
  $region20: #{forward.1} parent=0 // pred_region
    _
  $region21: #{forward.1} parent=0 // pred_fallthru
    _
  // Predicated region
  $region22: #{forward.1} parent=0 // pred_check
    _
  $region23: #{forward.1} parent=0 // pred_check_branch
    %24 = sbr.rel (0) target = $region25
  $region24: #{forward.1} parent=0 // pred_region
    _
  $region25: #{forward.1} parent=0 // pred_fallthru
    _
  // Predicated region
  $region26: #{forward.1} parent=0 // pred_check
    _
  $region27: #{forward.1} parent=0 // pred_check_branch
    %26 = sbr.rel (0) target = $region29
  $region28: #{forward.1} parent=0 // pred_region
    _
  $region29: #{forward.1} parent=0 // pred_fallthru
    _
  // Predicated region
  $region30: #{forward.1} parent=0 // pred_check
    _
  $region31: #{forward.1} parent=0 // pred_check_branch
    %28 = sbr.rel (0) target = $region33
  $region32: #{forward.1} parent=0 // pred_region
    _
  $region33: #{forward.1} parent=0 // pred_fallthru
    _
  %v30 = vld [vmem:[%s0] sm:$0xf]
  %v31 = vld [vmem:[%s0 + $0x4] sm:$0xf]
  %v32 = vld [vmem:[%s0 + $0x8] sm:$0xf]
  %v33 = vld [vmem:[%s0 + $0xc] sm:$0xf]
  %v34 = vld [vmem:[%s0 + $0x10] sm:$0x3]
  %v35 = vld [vmem:[%s1] sm:$0xf]
  %v36 = vld [vmem:[%s1 + $0x4] sm:$0xf]
  %v39 = vunpack.c.l.b16 %v35
  %v40 = vunpack.c.l.b16 %v36
  %v41 = vpack.c.b16 %v40, %v39
  %v47 = vunpack.c.l.b16 %v30
  %v48 = vunpack.c.l.b16 %v31
  %v49 = vunpack.c.l.b16 %v32
  %v50 = vunpack.c.l.b16 %v33
  %v51 = vunpack.c.l.b16 %v34
  %v52 = vpack.c.b16 %v48, %v47
  %v53 = vpack.c.b16 %v50, %v49
  %v54 = vpack.c.b16 %v51, %v51
  %vm57 = vcmask 293888
  %v59 = vsel %vm57, %v41, 0
  %vm61 = vcmask 1041408
  %v63 = vsel %vm61, %v54, 0
  %65 = vmatprep.subr.bf16.mxu0 0
  %66 = vmatpush1.bf16.msra.mxu0 %v52
  %67 = vmatprep.subr.bf16.mxu0 0
  %68 = vmatpush1.bf16.msra.mxu0 %v53
  %69 = vmatprep.subr.bf16.mxu0 0
  %70 = vmatpush1.bf16.msra.mxu0 %v63
  %71 = vmatprep.subr.bf16.mxu0 0
  %72 = vmatpush1.bf16.msra.mxu0 0
  %73 = vmatprep.subr.bf16.mxu0 0
  %74 = vmatpush1.bf16.msra.mxu0 0
  %75 = vmatprep.subr.bf16.mxu0 0
  %76 = vmatpush1.bf16.msra.mxu0 0
  %77 = vmatprep.subr.bf16.mxu0 0
  %78 = vmatpush1.bf16.msra.mxu0 0
  %79 = vmatprep.subr.bf16.mxu0 0
  %80 = vmatpush1.bf16.msra.mxu0 0
  %81 = vmatprep.subr.bf16.mxu0 0
  %82 = vmatpush1.bf16.msra.mxu0 0
  %83 = vmatprep.subr.bf16.mxu0 0
  %84 = vmatpush1.bf16.msra.mxu0 0
  %85 = vmatprep.subr.bf16.mxu0 0
  %86 = vmatpush1.bf16.msra.mxu0 0
  %87 = vmatprep.subr.bf16.mxu0 0
  %88 = vmatpush1.bf16.msra.mxu0 0
  %89 = vmatprep.subr.bf16.mxu0 0
  %90 = vmatpush1.bf16.msra.mxu0 0
  %91 = vmatprep.subr.bf16.mxu0 0
  %92 = vmatpush1.bf16.msra.mxu0 0
  %93 = vmatprep.subr.bf16.mxu0 0
  %94 = vmatpush1.bf16.msra.mxu0 0
  %95 = vmatprep.subr.bf16.mxu0 0
  %96 = vmatpush1.bf16.msra.mxu0 0
  %97 = vmatprep.mubr.bf16.mxu0 0
  %98 = vmatmul.mubr.bf16.gmra.mrb[0].mxu0 %v59
  %v99 = vpop.f32.mrb[0].mxu0
  %v100 = vadd.f32 0.0, %v99
  %v101 = vpop.f32.mrb[0].mxu0
  %v102 = vpop.f32.mrb[0].mxu0
  %v103 = vadd.f32 0.0, %v102
  %v104 = vpop.f32.mrb[0].mxu0
  %105 = vdwg.mxu0
  %v106 = vpack.c.bf16 %v103, %v100
  %v107 = vld [vmem:[%s2] sm:$0xff]
  %v108 = vld [vmem:[%s2 + $0x8] sm:$0xff]
  %v109 = vld [vmem:[%s2 + $0x10] sm:$0xff]
  %v110 = vld [vmem:[%s2 + $0x18] sm:$0xff]
  %v111 = vld [vmem:[%s2 + $0x20] sm:$0xff]
  %v112 = vld [vmem:[%s2 + $0x28] sm:$0xff]
  %v113 = vld [vmem:[%s2 + $0x30] sm:$0xff]
  %v114 = vld [vmem:[%s2 + $0x38] sm:$0xff]
  %v115 = vld [vmem:[%s2 + $0x40] sm:$0xff]
  %s116 = scalar_lea.vmem %s1, 8
  %v117 = vld [vmem:[%s116] sm:$0xf]
  %v118 = vld [vmem:[%s116 + $0x4] sm:$0xf]
  %v121 = vunpack.c.l.b16 %v117
  %v122 = vunpack.c.l.b16 %v118
  %v123 = vpack.c.b16 %v122, %v121
  %v125 = vsel %vm57, %v123, 0
  %127 = vmatprep.subr.bf16.mxu0 0
  %128 = vmatpush1.bf16.msra.mxu0 %v52
  %129 = vmatprep.subr.bf16.mxu0 0
  %130 = vmatpush1.bf16.msra.mxu0 %v53
  %131 = vmatprep.subr.bf16.mxu0 0
  %132 = vmatpush1.bf16.msra.mxu0 %v63
  %133 = vmatprep.subr.bf16.mxu0 0
  %134 = vmatpush1.bf16.msra.mxu0 0
  %135 = vmatprep.subr.bf16.mxu0 0
  %136 = vmatpush1.bf16.msra.mxu0 0
  %137 = vmatprep.subr.bf16.mxu0 0
  %138 = vmatpush1.bf16.msra.mxu0 0
  %139 = vmatprep.subr.bf16.mxu0 0
  %140 = vmatpush1.bf16.msra.mxu0 0
  %141 = vmatprep.subr.bf16.mxu0 0
  %142 = vmatpush1.bf16.msra.mxu0 0
  %143 = vmatprep.subr.bf16.mxu0 0
  %144 = vmatpush1.bf16.msra.mxu0 0
  %145 = vmatprep.subr.bf16.mxu0 0
  %146 = vmatpush1.bf16.msra.mxu0 0
  %147 = vmatprep.subr.bf16.mxu0 0
  %148 = vmatpush1.bf16.msra.mxu0 0
  %149 = vmatprep.subr.bf16.mxu0 0
  %150 = vmatpush1.bf16.msra.mxu0 0
  %151 = vmatprep.subr.bf16.mxu0 0
  %152 = vmatpush1.bf16.msra.mxu0 0
  %153 = vmatprep.subr.bf16.mxu0 0
  %154 = vmatpush1.bf16.msra.mxu0 0
  %155 = vmatprep.subr.bf16.mxu0 0
  %156 = vmatpush1.bf16.msra.mxu0 0
  %157 = vmatprep.subr.bf16.mxu0 0
  %158 = vmatpush1.bf16.msra.mxu0 0
  %159 = vmatprep.mubr.bf16.mxu0 0
  %160 = vmatmul.mubr.bf16.gmra.mrb[0].mxu0 %v125
  %v161 = vpop.f32.mrb[0].mxu0
  %v162 = vadd.f32 0.0, %v161
  %v163 = vpop.f32.mrb[0].mxu0
  %v164 = vpop.f32.mrb[0].mxu0
  %v165 = vadd.f32 0.0, %v164
  %v166 = vpop.f32.mrb[0].mxu0
  %167 = vdwg.mxu0
  %v168 = vpack.c.bf16 %v165, %v162
  %s169 = scalar_lea.vmem %s2, 72
  %v170 = vld [vmem:[%s169] sm:$0xff]
  %v171 = vld [vmem:[%s169 + $0x8] sm:$0xff]
  %v172 = vld [vmem:[%s169 + $0x10] sm:$0xff]
  %v173 = vld [vmem:[%s169 + $0x18] sm:$0xff]
  %v174 = vld [vmem:[%s169 + $0x20] sm:$0xff]
  %v175 = vld [vmem:[%s169 + $0x28] sm:$0xff]
  %v176 = vld [vmem:[%s169 + $0x30] sm:$0xff]
  %v177 = vld [vmem:[%s169 + $0x38] sm:$0xff]
  %v178 = vld [vmem:[%s169 + $0x40] sm:$0xff]
  %v188 = vunpack.c.l.b16 %v170
  %v189 = vunpack.c.h.b16 %v170
  %v190 = vunpack.c.l.b16 %v171
  %v191 = vunpack.c.h.b16 %v171
  %v192 = vunpack.c.l.b16 %v172
  %v193 = vunpack.c.h.b16 %v172
  %v194 = vunpack.c.l.b16 %v173
  %v195 = vunpack.c.h.b16 %v173
  %v196 = vunpack.c.l.b16 %v174
  %v197 = vunpack.c.h.b16 %v174
  %v198 = vunpack.c.l.b16 %v175
  %v199 = vunpack.c.h.b16 %v175
  %v200 = vunpack.c.l.b16 %v176
  %v201 = vunpack.c.h.b16 %v176
  %v202 = vunpack.c.l.b16 %v177
  %v203 = vunpack.c.h.b16 %v177
  %v204 = vunpack.c.l.b16 %v178
  %v205 = vunpack.c.h.b16 %v178
  %v206 = vpack.c.b16 %v190, %v188
  %v207 = vpack.c.b16 %v191, %v189
  %v208 = vpack.c.b16 %v194, %v192
  %v209 = vpack.c.b16 %v195, %v193
  %v210 = vpack.c.b16 %v198, %v196
  %v211 = vpack.c.b16 %v199, %v197
  %v212 = vpack.c.b16 %v202, %v200
  %v213 = vpack.c.b16 %v203, %v201
  %v214 = vpack.c.b16 %v204, %v204
  %v215 = vpack.c.b16 %v205, %v205
  %vm224 = vcmask 588800
  %v226 = vsel %vm224, %v168, 0
  %vm228 = vcmask 1043456
  %v230 = vsel %vm228, %v214, 0
  %v233 = vsel %vm228, %v215, 0
  %235 = vmatprep.subr.bf16.mxu0 %v207
  %236 = vmatpush1.bf16.msra.mxu0 %v206
  %237 = vmatprep.subr.bf16.mxu0 %v209
  %238 = vmatpush1.bf16.msra.mxu0 %v208
  %239 = vmatprep.subr.bf16.mxu0 %v211
  %240 = vmatpush1.bf16.msra.mxu0 %v210
  %241 = vmatprep.subr.bf16.mxu0 %v213
  %242 = vmatpush1.bf16.msra.mxu0 %v212
  %243 = vmatprep.subr.bf16.mxu0 %v233
  %244 = vmatpush1.bf16.msra.mxu0 %v230
  %245 = vmatprep.subr.bf16.mxu0 0
  %246 = vmatpush1.bf16.msra.mxu0 0
  %247 = vmatprep.subr.bf16.mxu0 0
  %248 = vmatpush1.bf16.msra.mxu0 0
  %249 = vmatprep.subr.bf16.mxu0 0
  %250 = vmatpush1.bf16.msra.mxu0 0
  %251 = vmatprep.subr.bf16.mxu0 0
  %252 = vmatpush1.bf16.msra.mxu0 0
  %253 = vmatprep.subr.bf16.mxu0 0
  %254 = vmatpush1.bf16.msra.mxu0 0
  %255 = vmatprep.subr.bf16.mxu0 0
  %256 = vmatpush1.bf16.msra.mxu0 0
  %257 = vmatprep.subr.bf16.mxu0 0
  %258 = vmatpush1.bf16.msra.mxu0 0
  %259 = vmatprep.subr.bf16.mxu0 0
  %260 = vmatpush1.bf16.msra.mxu0 0
  %261 = vmatprep.subr.bf16.mxu0 0
  %262 = vmatpush1.bf16.msra.mxu0 0
  %263 = vmatprep.subr.bf16.mxu0 0
  %264 = vmatpush1.bf16.msra.mxu0 0
  %265 = vmatprep.subr.bf16.mxu0 0
  %266 = vmatpush1.bf16.msra.mxu0 0
  %267 = vmatprep.mubr.bf16.mxu0 0
  %268 = vmatmul.mubr.bf16.gmra.mrb[0].mxu0 %v226
  %v269 = vpop.f32.mrb[0].mxu0
  %v270 = vadd.f32 0.0, %v269
  %v271 = vpop.f32.mrb[0].mxu0
  %v272 = vadd.f32 0.0, %v271
  %v273 = vpop.f32.mrb[0].mxu0
  %v274 = vadd.f32 0.0, %v273
  %v275 = vpop.f32.mrb[0].mxu0
  %v276 = vadd.f32 0.0, %v275
  %277 = vdwg.mxu0
  %v287 = vunpack.c.l.b16 %v107
  %v288 = vunpack.c.h.b16 %v107
  %v289 = vunpack.c.l.b16 %v108
  %v290 = vunpack.c.h.b16 %v108
  %v291 = vunpack.c.l.b16 %v109
  %v292 = vunpack.c.h.b16 %v109
  %v293 = vunpack.c.l.b16 %v110
  %v294 = vunpack.c.h.b16 %v110
  %v295 = vunpack.c.l.b16 %v111
  %v296 = vunpack.c.h.b16 %v111
  %v297 = vunpack.c.l.b16 %v112
  %v298 = vunpack.c.h.b16 %v112
  %v299 = vunpack.c.l.b16 %v113
  %v300 = vunpack.c.h.b16 %v113
  %v301 = vunpack.c.l.b16 %v114
  %v302 = vunpack.c.h.b16 %v114
  %v303 = vunpack.c.l.b16 %v115
  %v304 = vunpack.c.h.b16 %v115
  %v305 = vpack.c.b16 %v289, %v287
  %v306 = vpack.c.b16 %v290, %v288
  %v307 = vpack.c.b16 %v293, %v291
  %v308 = vpack.c.b16 %v294, %v292
  %v309 = vpack.c.b16 %v297, %v295
  %v310 = vpack.c.b16 %v298, %v296
  %v311 = vpack.c.b16 %v301, %v299
  %v312 = vpack.c.b16 %v302, %v300
  %v313 = vpack.c.b16 %v303, %v303
  %v314 = vpack.c.b16 %v304, %v304
  %v324 = vsel %vm224, %v106, 0
  %v327 = vsel %vm228, %v313, 0
  %v330 = vsel %vm228, %v314, 0
  %332 = vmatprep.subr.bf16.mxu0 %v306
  %333 = vmatpush1.bf16.msra.mxu0 %v305
  %334 = vmatprep.subr.bf16.mxu0 %v308
  %335 = vmatpush1.bf16.msra.mxu0 %v307
  %336 = vmatprep.subr.bf16.mxu0 %v310
  %337 = vmatpush1.bf16.msra.mxu0 %v309
  %338 = vmatprep.subr.bf16.mxu0 %v312
  %339 = vmatpush1.bf16.msra.mxu0 %v311
  %340 = vmatprep.subr.bf16.mxu0 %v330
  %341 = vmatpush1.bf16.msra.mxu0 %v327
  %342 = vmatprep.subr.bf16.mxu0 0
  %343 = vmatpush1.bf16.msra.mxu0 0
  %344 = vmatprep.subr.bf16.mxu0 0
  %345 = vmatpush1.bf16.msra.mxu0 0
  %346 = vmatprep.subr.bf16.mxu0 0
  %347 = vmatpush1.bf16.msra.mxu0 0
  %348 = vmatprep.subr.bf16.mxu0 0
  %349 = vmatpush1.bf16.msra.mxu0 0
  %350 = vmatprep.subr.bf16.mxu0 0
  %351 = vmatpush1.bf16.msra.mxu0 0
  %352 = vmatprep.subr.bf16.mxu0 0
  %353 = vmatpush1.bf16.msra.mxu0 0
  %354 = vmatprep.subr.bf16.mxu0 0
  %355 = vmatpush1.bf16.msra.mxu0 0
  %356 = vmatprep.subr.bf16.mxu0 0
  %357 = vmatpush1.bf16.msra.mxu0 0
  %358 = vmatprep.subr.bf16.mxu0 0
  %359 = vmatpush1.bf16.msra.mxu0 0
  %360 = vmatprep.subr.bf16.mxu0 0
  %361 = vmatpush1.bf16.msra.mxu0 0
  %362 = vmatprep.subr.bf16.mxu0 0
  %363 = vmatpush1.bf16.msra.mxu0 0
  %364 = vmatprep.mubr.bf16.mxu0 0
  %365 = vmatmul.mubr.bf16.gmra.mrb[0].mxu0 %v324
  %v366 = vpop.f32.mrb[0].mxu0
  %v367 = vadd.f32 %v270, %v366
  %v368 = vpop.f32.mrb[0].mxu0
  %v369 = vadd.f32 %v272, %v368
  %v370 = vpop.f32.mrb[0].mxu0
  %v371 = vadd.f32 %v274, %v370
  %v372 = vpop.f32.mrb[0].mxu0
  %v373 = vadd.f32 %v276, %v372
  %374 = vdwg.mxu0
  %s375 = scalar_lea.vmem %s1, 16
  %v376 = vld [vmem:[%s375] sm:$0xf]
  %v377 = vld [vmem:[%s375 + $0x4] sm:$0xf]
  %v380 = vunpack.c.l.b16 %v376
  %v381 = vunpack.c.l.b16 %v377
  %v382 = vpack.c.b16 %v381, %v380
  %v384 = vsel %vm57, %v382, 0
  %386 = vmatprep.subr.bf16.mxu0 0
  %387 = vmatpush1.bf16.msra.mxu0 %v52
  %388 = vmatprep.subr.bf16.mxu0 0
  %389 = vmatpush1.bf16.msra.mxu0 %v53
  %390 = vmatprep.subr.bf16.mxu0 0
  %391 = vmatpush1.bf16.msra.mxu0 %v63
  %392 = vmatprep.subr.bf16.mxu0 0
  %393 = vmatpush1.bf16.msra.mxu0 0
  %394 = vmatprep.subr.bf16.mxu0 0
  %395 = vmatpush1.bf16.msra.mxu0 0
  %396 = vmatprep.subr.bf16.mxu0 0
  %397 = vmatpush1.bf16.msra.mxu0 0
  %398 = vmatprep.subr.bf16.mxu0 0
  %399 = vmatpush1.bf16.msra.mxu0 0
  %400 = vmatprep.subr.bf16.mxu0 0
  %401 = vmatpush1.bf16.msra.mxu0 0
  %402 = vmatprep.subr.bf16.mxu0 0
  %403 = vmatpush1.bf16.msra.mxu0 0
  %404 = vmatprep.subr.bf16.mxu0 0
  %405 = vmatpush1.bf16.msra.mxu0 0
  %406 = vmatprep.subr.bf16.mxu0 0
  %407 = vmatpush1.bf16.msra.mxu0 0
  %408 = vmatprep.subr.bf16.mxu0 0
  %409 = vmatpush1.bf16.msra.mxu0 0
  %410 = vmatprep.subr.bf16.mxu0 0
  %411 = vmatpush1.bf16.msra.mxu0 0
  %412 = vmatprep.subr.bf16.mxu0 0
  %413 = vmatpush1.bf16.msra.mxu0 0
  %414 = vmatprep.subr.bf16.mxu0 0
  %415 = vmatpush1.bf16.msra.mxu0 0
  %416 = vmatprep.subr.bf16.mxu0 0
  %417 = vmatpush1.bf16.msra.mxu0 0
  %418 = vmatprep.mubr.bf16.mxu0 0
  %419 = vmatmul.mubr.bf16.gmra.mrb[0].mxu0 %v384
  %v420 = vpop.f32.mrb[0].mxu0
  %v421 = vadd.f32 0.0, %v420
  %v422 = vpop.f32.mrb[0].mxu0
  %v423 = vpop.f32.mrb[0].mxu0
  %v424 = vadd.f32 0.0, %v423
  %v425 = vpop.f32.mrb[0].mxu0
  %426 = vdwg.mxu0
  %v427 = vpack.c.bf16 %v424, %v421
  %s428 = scalar_lea.vmem %s2, 144
  %v429 = vld [vmem:[%s428] sm:$0xff]
  %v430 = vld [vmem:[%s428 + $0x8] sm:$0xff]
  %v431 = vld [vmem:[%s428 + $0x10] sm:$0xff]
  %v432 = vld [vmem:[%s428 + $0x18] sm:$0xff]
  %v433 = vld [vmem:[%s428 + $0x20] sm:$0xff]
  %v434 = vld [vmem:[%s428 + $0x28] sm:$0xff]
  %v435 = vld [vmem:[%s428 + $0x30] sm:$0xff]
  %v436 = vld [vmem:[%s428 + $0x38] sm:$0xff]
  %v437 = vld [vmem:[%s428 + $0x40] sm:$0xff]
  %v447 = vunpack.c.l.b16 %v429
  %v448 = vunpack.c.h.b16 %v429
  %v449 = vunpack.c.l.b16 %v430
  %v450 = vunpack.c.h.b16 %v430
  %v451 = vunpack.c.l.b16 %v431
  %v452 = vunpack.c.h.b16 %v431
  %v453 = vunpack.c.l.b16 %v432
  %v454 = vunpack.c.h.b16 %v432
  %v455 = vunpack.c.l.b16 %v433
  %v456 = vunpack.c.h.b16 %v433
  %v457 = vunpack.c.l.b16 %v434
  %v458 = vunpack.c.h.b16 %v434
  %v459 = vunpack.c.l.b16 %v435
  %v460 = vunpack.c.h.b16 %v435
  %v461 = vunpack.c.l.b16 %v436
  %v462 = vunpack.c.h.b16 %v436
  %v463 = vunpack.c.l.b16 %v437
  %v464 = vunpack.c.h.b16 %v437
  %v465 = vpack.c.b16 %v449, %v447
  %v466 = vpack.c.b16 %v450, %v448
  %v467 = vpack.c.b16 %v453, %v451
  %v468 = vpack.c.b16 %v454, %v452
  %v469 = vpack.c.b16 %v457, %v455
  %v470 = vpack.c.b16 %v458, %v456
  %v471 = vpack.c.b16 %v461, %v459
  %v472 = vpack.c.b16 %v462, %v460
  %v473 = vpack.c.b16 %v463, %v463
  %v474 = vpack.c.b16 %v464, %v464
  %v484 = vsel %vm224, %v427, 0
  %v487 = vsel %vm228, %v473, 0
  %v490 = vsel %vm228, %v474, 0
  %492 = vmatprep.subr.bf16.mxu0 %v466
  %493 = vmatpush1.bf16.msra.mxu0 %v465
  %494 = vmatprep.subr.bf16.mxu0 %v468
  %495 = vmatpush1.bf16.msra.mxu0 %v467
  %496 = vmatprep.subr.bf16.mxu0 %v470
  %497 = vmatpush1.bf16.msra.mxu0 %v469
  %498 = vmatprep.subr.bf16.mxu0 %v472
  %499 = vmatpush1.bf16.msra.mxu0 %v471
  %500 = vmatprep.subr.bf16.mxu0 %v490
  %501 = vmatpush1.bf16.msra.mxu0 %v487
  %502 = vmatprep.subr.bf16.mxu0 0
  %503 = vmatpush1.bf16.msra.mxu0 0
  %504 = vmatprep.subr.bf16.mxu0 0
  %505 = vmatpush1.bf16.msra.mxu0 0
  %506 = vmatprep.subr.bf16.mxu0 0
  %507 = vmatpush1.bf16.msra.mxu0 0
  %508 = vmatprep.subr.bf16.mxu0 0
  %509 = vmatpush1.bf16.msra.mxu0 0
  %510 = vmatprep.subr.bf16.mxu0 0
  %511 = vmatpush1.bf16.msra.mxu0 0
  %512 = vmatprep.subr.bf16.mxu0 0
  %513 = vmatpush1.bf16.msra.mxu0 0
  %514 = vmatprep.subr.bf16.mxu0 0
  %515 = vmatpush1.bf16.msra.mxu0 0
  %516 = vmatprep.subr.bf16.mxu0 0
  %517 = vmatpush1.bf16.msra.mxu0 0
  %518 = vmatprep.subr.bf16.mxu0 0
  %519 = vmatpush1.bf16.msra.mxu0 0
  %520 = vmatprep.subr.bf16.mxu0 0
  %521 = vmatpush1.bf16.msra.mxu0 0
  %522 = vmatprep.subr.bf16.mxu0 0
  %523 = vmatpush1.bf16.msra.mxu0 0
  %524 = vmatprep.mubr.bf16.mxu0 0
  %525 = vmatmul.mubr.bf16.gmra.mrb[0].mxu0 %v484
  %v526 = vpop.f32.mrb[0].mxu0
  %v527 = vadd.f32 0.0, %v526
  %v528 = vpop.f32.mrb[0].mxu0
  %v529 = vadd.f32 0.0, %v528
  %v530 = vpop.f32.mrb[0].mxu0
  %v531 = vadd.f32 0.0, %v530
  %v532 = vpop.f32.mrb[0].mxu0
  %v533 = vadd.f32 0.0, %v532
  %534 = vdwg.mxu0
  %v535 = vadd.f32 %v367, %v527
  %v536 = vadd.f32 %v369, %v529
  %v537 = vadd.f32 %v371, %v531
  %v538 = vadd.f32 %v373, %v533
  %v539 = vmax.f32 %v535, 0.0
  %v540 = vmax.f32 %v536, 0.0
  %v541 = vmax.f32 %v537, 0.0
  %v542 = vmax.f32 %v538, 0.0
  %v543 = vpack.c.bf16 %v541, %v539
  %v544 = vpack.c.bf16 %v542, %v540
  %v545 = vld [vmem:[%s3] sm:$0xff]
  %v546 = vld [vmem:[%s3 + $0x8] sm:$0xff]
  %v547 = vld [vmem:[%s3 + $0x10] sm:$0xff]
  %v548 = vld [vmem:[%s3 + $0x18] sm:$0xff]
  %v549 = vld [vmem:[%s3 + $0x20] sm:$0xff]
  %v550 = vld [vmem:[%s3 + $0x28] sm:$0xff]
  %v551 = vld [vmem:[%s3 + $0x30] sm:$0xff]
  %v552 = vld [vmem:[%s3 + $0x38] sm:$0xff]
  %v553 = vld [vmem:[%s3 + $0x40] sm:$0xff]
  %v554 = vld [vmem:[%s3 + $0x48] sm:$0xff]
  %v555 = vld [vmem:[%s3 + $0x50] sm:$0xff]
  %v556 = vld [vmem:[%s3 + $0x58] sm:$0xff]
  %v557 = vld [vmem:[%s3 + $0x60] sm:$0xff]
  %v558 = vld [vmem:[%s3 + $0x68] sm:$0xff]
  %v559 = vld [vmem:[%s3 + $0x70] sm:$0xff]
  %v560 = vld [vmem:[%s3 + $0x78] sm:$0xff]
  %v561 = vld [vmem:[%s3 + $0x80] sm:$0xff]
  %v562 = vld [vmem:[%s3 + $0x88] sm:$0xff]
  %v563 = vld [vmem:[%s3 + $0x90] sm:$0xff]
  %v564 = vld [vmem:[%s3 + $0x98] sm:$0xff]
  %v565 = vld [vmem:[%s3 + $0xa0] sm:$0xff]
  %v566 = vld [vmem:[%s3 + $0xa8] sm:$0xff]
  %v567 = vld [vmem:[%s3 + $0xb0] sm:$0xff]
  %v568 = vld [vmem:[%s3 + $0xb8] sm:$0xff]
  %v569 = vld [vmem:[%s3 + $0xc0] sm:$0xff]
  %v570 = vld [vmem:[%s3 + $0xc8] sm:$0xff]
  %v571 = vld [vmem:[%s3 + $0xd0] sm:$0xff]
  %v572 = vld [vmem:[%s3 + $0xd8] sm:$0xff]
  %v573 = vld [vmem:[%s3 + $0xe0] sm:$0xff]
  %v574 = vld [vmem:[%s3 + $0xe8] sm:$0xff]
  %v575 = vld [vmem:[%s3 + $0xf0] sm:$0xff]
  %v576 = vld [vmem:[%s3 + $0xf8] sm:$0xff]
  %v577 = vld [vmem:[%s3 + $0x100] sm:$0xff]
  %v578 = vld [vmem:[%s3 + $0x108] sm:$0xff]
  %v579 = vld [vmem:[%s3 + $0x110] sm:$0xff]
  %v580 = vld [vmem:[%s3 + $0x118] sm:$0xff]
  %v581 = vld [vmem:[%s3 + $0x120] sm:$0xff]
  %v582 = vld [vmem:[%s3 + $0x128] sm:$0xff]
  %v583 = vld [vmem:[%s3 + $0x130] sm:$0xff]
  %v584 = vld [vmem:[%s3 + $0x138] sm:$0xff]
  %v585 = vld [vmem:[%s3 + $0x140] sm:$0xff]
  %v586 = vld [vmem:[%s3 + $0x148] sm:$0xff]
  %v587 = vld [vmem:[%s3 + $0x150] sm:$0xff]
  %v588 = vld [vmem:[%s3 + $0x158] sm:$0xff]
  %v589 = vld [vmem:[%s3 + $0x160] sm:$0xff]
  %v590 = vld [vmem:[%s3 + $0x168] sm:$0xff]
  %v591 = vld [vmem:[%s3 + $0x170] sm:$0xff]
  %v592 = vld [vmem:[%s3 + $0x178] sm:$0xff]
  %v593 = vld [vmem:[%s3 + $0x180] sm:$0xff]
  %v594 = vld [vmem:[%s3 + $0x188] sm:$0xff]
  %v595 = vld [vmem:[%s3 + $0x190] sm:$0xff]
  %v596 = vld [vmem:[%s3 + $0x198] sm:$0xff]
  %v597 = vld [vmem:[%s3 + $0x1a0] sm:$0xff]
  %v598 = vld [vmem:[%s3 + $0x1a8] sm:$0xff]
  %v599 = vld [vmem:[%s3 + $0x1b0] sm:$0xff]
  %v600 = vld [vmem:[%s3 + $0x1b8] sm:$0xff]
  %v601 = vld [vmem:[%s3 + $0x1c0] sm:$0xff]
  %v602 = vld [vmem:[%s3 + $0x1c8] sm:$0xff]
  %v603 = vld [vmem:[%s3 + $0x1d0] sm:$0xff]
  %v604 = vld [vmem:[%s3 + $0x1d8] sm:$0xff]
  %v605 = vld [vmem:[%s3 + $0x1e0] sm:$0xff]
  %v606 = vld [vmem:[%s3 + $0x1e8] sm:$0xff]
  %v607 = vld [vmem:[%s3 + $0x1f0] sm:$0xff]
  %v608 = vld [vmem:[%s3 + $0x1f8] sm:$0xff]
  %v673 = vunpack.c.l.b16 %v545
  %v674 = vunpack.c.h.b16 %v545
  %v675 = vunpack.c.l.b16 %v546
  %v676 = vunpack.c.h.b16 %v546
  %v677 = vunpack.c.l.b16 %v547
  %v678 = vunpack.c.h.b16 %v547
  %v679 = vunpack.c.l.b16 %v548
  %v680 = vunpack.c.h.b16 %v548
  %v681 = vunpack.c.l.b16 %v549
  %v682 = vunpack.c.h.b16 %v549
  %v683 = vunpack.c.l.b16 %v550
  %v684 = vunpack.c.h.b16 %v550
  %v685 = vunpack.c.l.b16 %v551
  %v686 = vunpack.c.h.b16 %v551
  %v687 = vunpack.c.l.b16 %v552
  %v688 = vunpack.c.h.b16 %v552
  %v689 = vunpack.c.l.b16 %v553
  %v690 = vunpack.c.h.b16 %v553
  %v691 = vunpack.c.l.b16 %v554
  %v692 = vunpack.c.h.b16 %v554
  %v693 = vunpack.c.l.b16 %v555
  %v694 = vunpack.c.h.b16 %v555
  %v695 = vunpack.c.l.b16 %v556
  %v696 = vunpack.c.h.b16 %v556
  %v697 = vunpack.c.l.b16 %v557
  %v698 = vunpack.c.h.b16 %v557
  %v699 = vunpack.c.l.b16 %v558
  %v700 = vunpack.c.h.b16 %v558
  %v701 = vunpack.c.l.b16 %v559
  %v702 = vunpack.c.h.b16 %v559
  %v703 = vunpack.c.l.b16 %v560
  %v704 = vunpack.c.h.b16 %v560
  %v705 = vunpack.c.l.b16 %v561
  %v706 = vunpack.c.h.b16 %v561
  %v707 = vunpack.c.l.b16 %v562
  %v708 = vunpack.c.h.b16 %v562
  %v709 = vunpack.c.l.b16 %v563
  %v710 = vunpack.c.h.b16 %v563
  %v711 = vunpack.c.l.b16 %v564
  %v712 = vunpack.c.h.b16 %v564
  %v713 = vunpack.c.l.b16 %v565
  %v714 = vunpack.c.h.b16 %v565
  %v715 = vunpack.c.l.b16 %v566
  %v716 = vunpack.c.h.b16 %v566
  %v717 = vunpack.c.l.b16 %v567
  %v718 = vunpack.c.h.b16 %v567
  %v719 = vunpack.c.l.b16 %v568
  %v720 = vunpack.c.h.b16 %v568
  %v721 = vunpack.c.l.b16 %v569
  %v722 = vunpack.c.h.b16 %v569
  %v723 = vunpack.c.l.b16 %v570
  %v724 = vunpack.c.h.b16 %v570
  %v725 = vunpack.c.l.b16 %v571
  %v726 = vunpack.c.h.b16 %v571
  %v727 = vunpack.c.l.b16 %v572
  %v728 = vunpack.c.h.b16 %v572
  %v729 = vunpack.c.l.b16 %v573
  %v730 = vunpack.c.h.b16 %v573
  %v731 = vunpack.c.l.b16 %v574
  %v732 = vunpack.c.h.b16 %v574
  %v733 = vunpack.c.l.b16 %v575
  %v734 = vunpack.c.h.b16 %v575
  %v735 = vunpack.c.l.b16 %v576
  %v736 = vunpack.c.h.b16 %v576
  %v737 = vunpack.c.l.b16 %v577
  %v738 = vunpack.c.h.b16 %v577
  %v739 = vunpack.c.l.b16 %v578
  %v740 = vunpack.c.h.b16 %v578
  %v741 = vunpack.c.l.b16 %v579
  %v742 = vunpack.c.h.b16 %v579
  %v743 = vunpack.c.l.b16 %v580
  %v744 = vunpack.c.h.b16 %v580
  %v745 = vunpack.c.l.b16 %v581
  %v746 = vunpack.c.h.b16 %v581
  %v747 = vunpack.c.l.b16 %v582
  %v748 = vunpack.c.h.b16 %v582
  %v749 = vunpack.c.l.b16 %v583
  %v750 = vunpack.c.h.b16 %v583
  %v751 = vunpack.c.l.b16 %v584
  %v752 = vunpack.c.h.b16 %v584
  %v753 = vunpack.c.l.b16 %v585
  %v754 = vunpack.c.h.b16 %v585
  %v755 = vunpack.c.l.b16 %v586
  %v756 = vunpack.c.h.b16 %v586
  %v757 = vunpack.c.l.b16 %v587
  %v758 = vunpack.c.h.b16 %v587
  %v759 = vunpack.c.l.b16 %v588
  %v760 = vunpack.c.h.b16 %v588
  %v761 = vunpack.c.l.b16 %v589
  %v762 = vunpack.c.h.b16 %v589
  %v763 = vunpack.c.l.b16 %v590
  %v764 = vunpack.c.h.b16 %v590
  %v765 = vunpack.c.l.b16 %v591
  %v766 = vunpack.c.h.b16 %v591
  %v767 = vunpack.c.l.b16 %v592
  %v768 = vunpack.c.h.b16 %v592
  %v769 = vunpack.c.l.b16 %v593
  %v770 = vunpack.c.h.b16 %v593
  %v771 = vunpack.c.l.b16 %v594
  %v772 = vunpack.c.h.b16 %v594
  %v773 = vunpack.c.l.b16 %v595
  %v774 = vunpack.c.h.b16 %v595
  %v775 = vunpack.c.l.b16 %v596
  %v776 = vunpack.c.h.b16 %v596
  %v777 = vunpack.c.l.b16 %v597
  %v778 = vunpack.c.h.b16 %v597
  %v779 = vunpack.c.l.b16 %v598
  %v780 = vunpack.c.h.b16 %v598
  %v781 = vunpack.c.l.b16 %v599
  %v782 = vunpack.c.h.b16 %v599
  %v783 = vunpack.c.l.b16 %v600
  %v784 = vunpack.c.h.b16 %v600
  %v785 = vunpack.c.l.b16 %v601
  %v786 = vunpack.c.h.b16 %v601
  %v787 = vunpack.c.l.b16 %v602
  %v788 = vunpack.c.h.b16 %v602
  %v789 = vunpack.c.l.b16 %v603
  %v790 = vunpack.c.h.b16 %v603
  %v791 = vunpack.c.l.b16 %v604
  %v792 = vunpack.c.h.b16 %v604
  %v793 = vunpack.c.l.b16 %v605
  %v794 = vunpack.c.h.b16 %v605
  %v795 = vunpack.c.l.b16 %v606
  %v796 = vunpack.c.h.b16 %v606
  %v797 = vunpack.c.l.b16 %v607
  %v798 = vunpack.c.h.b16 %v607
  %v799 = vunpack.c.l.b16 %v608
  %v800 = vunpack.c.h.b16 %v608
  %v801 = vpack.c.b16 %v677, %v673
  %v802 = vpack.c.b16 %v678, %v674
  %v803 = vpack.c.b16 %v679, %v675
  %v804 = vpack.c.b16 %v680, %v676
  %v805 = vpack.c.b16 %v685, %v681
  %v806 = vpack.c.b16 %v686, %v682
  %v807 = vpack.c.b16 %v687, %v683
  %v808 = vpack.c.b16 %v688, %v684
  %v809 = vpack.c.b16 %v693, %v689
  %v810 = vpack.c.b16 %v694, %v690
  %v811 = vpack.c.b16 %v695, %v691
  %v812 = vpack.c.b16 %v696, %v692
  %v813 = vpack.c.b16 %v701, %v697
  %v814 = vpack.c.b16 %v702, %v698
  %v815 = vpack.c.b16 %v703, %v699
  %v816 = vpack.c.b16 %v704, %v700
  %v817 = vpack.c.b16 %v709, %v705
  %v818 = vpack.c.b16 %v710, %v706
  %v819 = vpack.c.b16 %v711, %v707
  %v820 = vpack.c.b16 %v712, %v708
  %v821 = vpack.c.b16 %v717, %v713
  %v822 = vpack.c.b16 %v718, %v714
  %v823 = vpack.c.b16 %v719, %v715
  %v824 = vpack.c.b16 %v720, %v716
  %v825 = vpack.c.b16 %v725, %v721
  %v826 = vpack.c.b16 %v726, %v722
  %v827 = vpack.c.b16 %v727, %v723
  %v828 = vpack.c.b16 %v728, %v724
  %v829 = vpack.c.b16 %v733, %v729
  %v830 = vpack.c.b16 %v734, %v730
  %v831 = vpack.c.b16 %v735, %v731
  %v832 = vpack.c.b16 %v736, %v732
  %v833 = vpack.c.b16 %v741, %v737
  %v834 = vpack.c.b16 %v742, %v738
  %v835 = vpack.c.b16 %v743, %v739
  %v836 = vpack.c.b16 %v744, %v740
  %v837 = vpack.c.b16 %v749, %v745
  %v838 = vpack.c.b16 %v750, %v746
  %v839 = vpack.c.b16 %v751, %v747
  %v840 = vpack.c.b16 %v752, %v748
  %v841 = vpack.c.b16 %v757, %v753
  %v842 = vpack.c.b16 %v758, %v754
  %v843 = vpack.c.b16 %v759, %v755
  %v844 = vpack.c.b16 %v760, %v756
  %v845 = vpack.c.b16 %v765, %v761
  %v846 = vpack.c.b16 %v766, %v762
  %v847 = vpack.c.b16 %v767, %v763
  %v848 = vpack.c.b16 %v768, %v764
  %v849 = vpack.c.b16 %v773, %v769
  %v850 = vpack.c.b16 %v774, %v770
  %v851 = vpack.c.b16 %v775, %v771
  %v852 = vpack.c.b16 %v776, %v772
  %v853 = vpack.c.b16 %v781, %v777
  %v854 = vpack.c.b16 %v782, %v778
  %v855 = vpack.c.b16 %v783, %v779
  %v856 = vpack.c.b16 %v784, %v780
  %v857 = vpack.c.b16 %v789, %v785
  %v858 = vpack.c.b16 %v790, %v786
  %v859 = vpack.c.b16 %v791, %v787
  %v860 = vpack.c.b16 %v792, %v788
  %v861 = vpack.c.b16 %v797, %v793
  %v862 = vpack.c.b16 %v798, %v794
  %v863 = vpack.c.b16 %v799, %v795
  %v864 = vpack.c.b16 %v800, %v796
  %929 = vmatprep.subr.bf16.mxu0 %v802
  %930 = vmatpush1.bf16.msra.mxu0 %v801
  %931 = vmatprep.subr.bf16.mxu0 %v806
  %932 = vmatpush1.bf16.msra.mxu0 %v805
  %933 = vmatprep.subr.bf16.mxu0 %v810
  %934 = vmatpush1.bf16.msra.mxu0 %v809
  %935 = vmatprep.subr.bf16.mxu0 %v814
  %936 = vmatpush1.bf16.msra.mxu0 %v813
  %937 = vmatprep.subr.bf16.mxu0 %v818
  %938 = vmatpush1.bf16.msra.mxu0 %v817
  %939 = vmatprep.subr.bf16.mxu0 %v822
  %940 = vmatpush1.bf16.msra.mxu0 %v821
  %941 = vmatprep.subr.bf16.mxu0 %v826
  %942 = vmatpush1.bf16.msra.mxu0 %v825
  %943 = vmatprep.subr.bf16.mxu0 %v830
  %944 = vmatpush1.bf16.msra.mxu0 %v829
  %945 = vmatprep.subr.bf16.mxu0 %v834
  %946 = vmatpush1.bf16.msra.mxu0 %v833
  %947 = vmatprep.subr.bf16.mxu0 %v838
  %948 = vmatpush1.bf16.msra.mxu0 %v837
  %949 = vmatprep.subr.bf16.mxu0 %v842
  %950 = vmatpush1.bf16.msra.mxu0 %v841
  %951 = vmatprep.subr.bf16.mxu0 %v846
  %952 = vmatpush1.bf16.msra.mxu0 %v845
  %953 = vmatprep.subr.bf16.mxu0 %v850
  %954 = vmatpush1.bf16.msra.mxu0 %v849
  %955 = vmatprep.subr.bf16.mxu0 %v854
  %956 = vmatpush1.bf16.msra.mxu0 %v853
  %957 = vmatprep.subr.bf16.mxu0 %v858
  %958 = vmatpush1.bf16.msra.mxu0 %v857
  %959 = vmatprep.subr.bf16.mxu0 %v862
  %960 = vmatpush1.bf16.msra.mxu0 %v861
  %961 = vmatprep.mubr.bf16.mxu0 %v544
  %962 = vmatmul.mubr.bf16.gmra.mrb[0].mxu0 %v543
  %v963 = vpop.f32.mrb[0].mxu0
  %v964 = vadd.f32 0.0, %v963
  %v965 = vpop.f32.mrb[0].mxu0
  %v966 = vadd.f32 0.0, %v965
  %v967 = vpop.f32.mrb[0].mxu0
  %v968 = vadd.f32 0.0, %v967
  %v969 = vpop.f32.mrb[0].mxu0
  %v970 = vadd.f32 0.0, %v969
  %971 = vdwg.mxu0
  %972 = vmatprep.subr.bf16.mxu0 %v804
  %973 = vmatpush1.bf16.msra.mxu0 %v803
  %974 = vmatprep.subr.bf16.mxu0 %v808
  %975 = vmatpush1.bf16.msra.mxu0 %v807
  %976 = vmatprep.subr.bf16.mxu0 %v812
  %977 = vmatpush1.bf16.msra.mxu0 %v811
  %978 = vmatprep.subr.bf16.mxu0 %v816
  %979 = vmatpush1.bf16.msra.mxu0 %v815
  %980 = vmatprep.subr.bf16.mxu0 %v820
  %981 = vmatpush1.bf16.msra.mxu0 %v819
  %982 = vmatprep.subr.bf16.mxu0 %v824
  %983 = vmatpush1.bf16.msra.mxu0 %v823
  %984 = vmatprep.subr.bf16.mxu0 %v828
  %985 = vmatpush1.bf16.msra.mxu0 %v827
  %986 = vmatprep.subr.bf16.mxu0 %v832
  %987 = vmatpush1.bf16.msra.mxu0 %v831
  %988 = vmatprep.subr.bf16.mxu0 %v836
  %989 = vmatpush1.bf16.msra.mxu0 %v835
  %990 = vmatprep.subr.bf16.mxu0 %v840
  %991 = vmatpush1.bf16.msra.mxu0 %v839
  %992 = vmatprep.subr.bf16.mxu0 %v844
  %993 = vmatpush1.bf16.msra.mxu0 %v843
  %994 = vmatprep.subr.bf16.mxu0 %v848
  %995 = vmatpush1.bf16.msra.mxu0 %v847
  %996 = vmatprep.subr.bf16.mxu0 %v852
  %997 = vmatpush1.bf16.msra.mxu0 %v851
  %998 = vmatprep.subr.bf16.mxu0 %v856
  %999 = vmatpush1.bf16.msra.mxu0 %v855
  %1000 = vmatprep.subr.bf16.mxu0 %v860
  %1001 = vmatpush1.bf16.msra.mxu0 %v859
  %1002 = vmatprep.subr.bf16.mxu0 %v864
  %1003 = vmatpush1.bf16.msra.mxu0 %v863
  %1004 = vmatprep.mubr.bf16.mxu0 %v544
  %1005 = vmatmul.mubr.bf16.gmra.mrb[0].mxu0 %v543
  %v1006 = vpop.f32.mrb[0].mxu0
  %v1007 = vadd.f32 0.0, %v1006
  %v1008 = vpop.f32.mrb[0].mxu0
  %v1009 = vadd.f32 0.0, %v1008
  %v1010 = vpop.f32.mrb[0].mxu0
  %v1011 = vadd.f32 0.0, %v1010
  %v1012 = vpop.f32.mrb[0].mxu0
  %v1013 = vadd.f32 0.0, %v1012
  %1014 = vdwg.mxu0
  %v1015 = vmax.f32 %v964, 0.0
  %v1016 = vmax.f32 %v966, 0.0
  %v1017 = vmax.f32 %v1007, 0.0
  %v1018 = vmax.f32 %v1009, 0.0
  %v1019 = vmax.f32 %v968, 0.0
  %v1020 = vmax.f32 %v970, 0.0
  %v1021 = vmax.f32 %v1011, 0.0
  %v1022 = vmax.f32 %v1013, 0.0
  %v1023 = vpack.c.bf16 %v1019, %v1015
  %v1024 = vpack.c.bf16 %v1020, %v1016
  %v1025 = vpack.c.bf16 %v1021, %v1017
  %v1026 = vpack.c.bf16 %v1022, %v1018
  %v1027 = vld [vmem:[%s4] sm:$0x1]
  %vm1028 = vcmask 130048
  %v1030 = vsel %vm1028, %v1027, 0
  %1032 = vmatprep.subr.bf16.mxu0 %v1024
  %1033 = vmatpush1.bf16.msra.mxu0 %v1023
  %1034 = vmatprep.subr.bf16.mxu0 0
  %1035 = vmatpush1.bf16.msra.mxu0 0
  %1036 = vmatprep.subr.bf16.mxu0 0
  %1037 = vmatpush1.bf16.msra.mxu0 0
  %1038 = vmatprep.subr.bf16.mxu0 0
  %1039 = vmatpush1.bf16.msra.mxu0 0
  %1040 = vmatprep.subr.bf16.mxu0 0
  %1041 = vmatpush1.bf16.msra.mxu0 0
  %1042 = vmatprep.subr.bf16.mxu0 0
  %1043 = vmatpush1.bf16.msra.mxu0 0
  %1044 = vmatprep.subr.bf16.mxu0 0
  %1045 = vmatpush1.bf16.msra.mxu0 0
  %1046 = vmatprep.subr.bf16.mxu0 0
  %1047 = vmatpush1.bf16.msra.mxu0 0
  %1048 = vmatprep.subr.bf16.mxu0 0
  %1049 = vmatpush1.bf16.msra.mxu0 0
  %1050 = vmatprep.subr.bf16.mxu0 0
  %1051 = vmatpush1.bf16.msra.mxu0 0
  %1052 = vmatprep.subr.bf16.mxu0 0
  %1053 = vmatpush1.bf16.msra.mxu0 0
  %1054 = vmatprep.subr.bf16.mxu0 0
  %1055 = vmatpush1.bf16.msra.mxu0 0
  %1056 = vmatprep.subr.bf16.mxu0 0
  %1057 = vmatpush1.bf16.msra.mxu0 0
  %1058 = vmatprep.subr.bf16.mxu0 0
  %1059 = vmatpush1.bf16.msra.mxu0 0
  %1060 = vmatprep.subr.bf16.mxu0 0
  %1061 = vmatpush1.bf16.msra.mxu0 0
  %1062 = vmatprep.subr.bf16.mxu0 0
  %1063 = vmatpush1.bf16.msra.mxu0 0
  %1064 = vmatprep.mubr.bf16.mxu0 0
  %1065 = vmatmul.mubr.bf16.gmra.mrb[0].mxu0 %v1030
  %v1066 = vpop.f32.mrb[0].mxu0
  %v1067 = vadd.f32 0.0, %v1066
  %v1068 = vpop.f32.mrb[0].mxu0
  %v1069 = vadd.f32 0.0, %v1068
  %v1070 = vpop.f32.mrb[0].mxu0
  %v1071 = vpop.f32.mrb[0].mxu0
  %1072 = vdwg.mxu0
  %1073 = vmatprep.subr.bf16.mxu0 %v1026
  %1074 = vmatpush1.bf16.msra.mxu0 %v1025
  %1075 = vmatprep.subr.bf16.mxu0 0
  %1076 = vmatpush1.bf16.msra.mxu0 0
  %1077 = vmatprep.subr.bf16.mxu0 0
  %1078 = vmatpush1.bf16.msra.mxu0 0
  %1079 = vmatprep.subr.bf16.mxu0 0
  %1080 = vmatpush1.bf16.msra.mxu0 0
  %1081 = vmatprep.subr.bf16.mxu0 0
  %1082 = vmatpush1.bf16.msra.mxu0 0
  %1083 = vmatprep.subr.bf16.mxu0 0
  %1084 = vmatpush1.bf16.msra.mxu0 0
  %1085 = vmatprep.subr.bf16.mxu0 0
  %1086 = vmatpush1.bf16.msra.mxu0 0
  %1087 = vmatprep.subr.bf16.mxu0 0
  %1088 = vmatpush1.bf16.msra.mxu0 0
  %1089 = vmatprep.subr.bf16.mxu0 0
  %1090 = vmatpush1.bf16.msra.mxu0 0
  %1091 = vmatprep.subr.bf16.mxu0 0
  %1092 = vmatpush1.bf16.msra.mxu0 0
  %1093 = vmatprep.subr.bf16.mxu0 0
  %1094 = vmatpush1.bf16.msra.mxu0 0
  %1095 = vmatprep.subr.bf16.mxu0 0
  %1096 = vmatpush1.bf16.msra.mxu0 0
  %1097 = vmatprep.subr.bf16.mxu0 0
  %1098 = vmatpush1.bf16.msra.mxu0 0
  %1099 = vmatprep.subr.bf16.mxu0 0
  %1100 = vmatpush1.bf16.msra.mxu0 0
  %1101 = vmatprep.subr.bf16.mxu0 0
  %1102 = vmatpush1.bf16.msra.mxu0 0
  %1103 = vmatprep.subr.bf16.mxu0 0
  %1104 = vmatpush1.bf16.msra.mxu0 0
  %1105 = vmatprep.mubr.bf16.mxu0 0
  %1106 = vmatmul.mubr.bf16.gmra.mrb[0].mxu0 %v1030
  %v1107 = vpop.f32.mrb[0].mxu0
  %v1108 = vadd.f32 0.0, %v1107
  %v1109 = vpop.f32.mrb[0].mxu0
  %v1110 = vadd.f32 0.0, %v1109
  %v1111 = vpop.f32.mrb[0].mxu0
  %v1112 = vpop.f32.mrb[0].mxu0
  %1113 = vdwg.mxu0
  %v1114 = vpack.c.bf16 %v1067, %v1067
  %v1115 = vpack.c.bf16 %v1069, %v1069
  %v1116 = vpack.c.bf16 %v1108, %v1108
  %v1117 = vpack.c.bf16 %v1110, %v1110
  %v1118 = vld [vmem:[%s5] sm:$0xf]
  %v1119 = vld [vmem:[%s5 + $0x4] sm:$0xf]
  %v1120 = vld [vmem:[%s5 + $0x8] sm:$0xf]
  %v1121 = vld [vmem:[%s5 + $0xc] sm:$0xf]
  %v1122 = vld [vmem:[%s5 + $0x10] sm:$0xf]
  %v1123 = vld [vmem:[%s5 + $0x14] sm:$0xf]
  %v1124 = vld [vmem:[%s5 + $0x18] sm:$0xf]
  %v1125 = vld [vmem:[%s5 + $0x1c] sm:$0xf]
  %v1126 = vld [vmem:[%s5 + $0x20] sm:$0xf]
  %v1127 = vld [vmem:[%s5 + $0x24] sm:$0xf]
  %v1128 = vld [vmem:[%s5 + $0x28] sm:$0xf]
  %v1129 = vld [vmem:[%s5 + $0x2c] sm:$0xf]
  %v1130 = vld [vmem:[%s5 + $0x30] sm:$0xf]
  %v1131 = vld [vmem:[%s5 + $0x34] sm:$0xf]
  %v1132 = vld [vmem:[%s5 + $0x38] sm:$0xf]
  %v1133 = vld [vmem:[%s5 + $0x3c] sm:$0xf]
  %v1134 = vld [vmem:[%s5 + $0x40] sm:$0xf]
  %v1135 = vld [vmem:[%s5 + $0x44] sm:$0xf]
  %v1136 = vld [vmem:[%s5 + $0x48] sm:$0xf]
  %v1137 = vld [vmem:[%s5 + $0x4c] sm:$0xf]
  %v1138 = vld [vmem:[%s5 + $0x50] sm:$0xf]
  %v1139 = vld [vmem:[%s5 + $0x54] sm:$0xf]
  %v1140 = vld [vmem:[%s5 + $0x58] sm:$0xf]
  %v1141 = vld [vmem:[%s5 + $0x5c] sm:$0xf]
  %v1142 = vld [vmem:[%s5 + $0x60] sm:$0xf]
  %v1143 = vld [vmem:[%s5 + $0x64] sm:$0xf]
  %v1144 = vld [vmem:[%s5 + $0x68] sm:$0xf]
  %v1145 = vld [vmem:[%s5 + $0x6c] sm:$0xf]
  %v1146 = vld [vmem:[%s5 + $0x70] sm:$0xf]
  %v1147 = vld [vmem:[%s5 + $0x74] sm:$0xf]
  %v1148 = vld [vmem:[%s5 + $0x78] sm:$0xf]
  %v1149 = vld [vmem:[%s5 + $0x7c] sm:$0xf]
  %v1150 = vld [vmem:[%s5 + $0x80] sm:$0xf]
  %v1151 = vld [vmem:[%s5 + $0x84] sm:$0xf]
  %v1152 = vld [vmem:[%s5 + $0x88] sm:$0xf]
  %v1153 = vld [vmem:[%s5 + $0x8c] sm:$0xf]
  %v1154 = vld [vmem:[%s5 + $0x90] sm:$0xf]
  %v1155 = vld [vmem:[%s5 + $0x94] sm:$0xf]
  %v1156 = vld [vmem:[%s5 + $0x98] sm:$0xf]
  %v1157 = vld [vmem:[%s5 + $0x9c] sm:$0xf]
  %v1158 = vld [vmem:[%s5 + $0xa0] sm:$0xf]
  %v1159 = vld [vmem:[%s5 + $0xa4] sm:$0xf]
  %v1160 = vld [vmem:[%s5 + $0xa8] sm:$0xf]
  %v1161 = vld [vmem:[%s5 + $0xac] sm:$0xf]
  %v1162 = vld [vmem:[%s5 + $0xb0] sm:$0xf]
  %v1163 = vld [vmem:[%s5 + $0xb4] sm:$0xf]
  %v1164 = vld [vmem:[%s5 + $0xb8] sm:$0xf]
  %v1165 = vld [vmem:[%s5 + $0xbc] sm:$0xf]
  %v1166 = vld [vmem:[%s5 + $0xc0] sm:$0xf]
  %v1167 = vld [vmem:[%s5 + $0xc4] sm:$0xf]
  %v1168 = vld [vmem:[%s5 + $0xc8] sm:$0xf]
  %v1169 = vld [vmem:[%s5 + $0xcc] sm:$0xf]
  %v1170 = vld [vmem:[%s5 + $0xd0] sm:$0xf]
  %v1171 = vld [vmem:[%s5 + $0xd4] sm:$0xf]
  %v1172 = vld [vmem:[%s5 + $0xd8] sm:$0xf]
  %v1173 = vld [vmem:[%s5 + $0xdc] sm:$0xf]
  %v1174 = vld [vmem:[%s5 + $0xe0] sm:$0xf]
  %v1175 = vld [vmem:[%s5 + $0xe4] sm:$0xf]
  %v1176 = vld [vmem:[%s5 + $0xe8] sm:$0xf]
  %v1177 = vld [vmem:[%s5 + $0xec] sm:$0xf]
  %v1178 = vld [vmem:[%s5 + $0xf0] sm:$0xf]
  %v1179 = vld [vmem:[%s5 + $0xf4] sm:$0xf]
  %v1180 = vld [vmem:[%s5 + $0xf8] sm:$0xf]
  %v1181 = vld [vmem:[%s5 + $0xfc] sm:$0xf]
  %v1246 = vunpack.c.l.b16 %v1118
  %v1247 = vunpack.c.l.b16 %v1119
  %v1248 = vunpack.c.l.b16 %v1120
  %v1249 = vunpack.c.l.b16 %v1121
  %v1250 = vunpack.c.l.b16 %v1122
  %v1251 = vunpack.c.l.b16 %v1123
  %v1252 = vunpack.c.l.b16 %v1124
  %v1253 = vunpack.c.l.b16 %v1125
  %v1254 = vunpack.c.l.b16 %v1126
  %v1255 = vunpack.c.l.b16 %v1127
  %v1256 = vunpack.c.l.b16 %v1128
  %v1257 = vunpack.c.l.b16 %v1129
  %v1258 = vunpack.c.l.b16 %v1130
  %v1259 = vunpack.c.l.b16 %v1131
  %v1260 = vunpack.c.l.b16 %v1132
  %v1261 = vunpack.c.l.b16 %v1133
  %v1262 = vunpack.c.l.b16 %v1134
  %v1263 = vunpack.c.l.b16 %v1135
  %v1264 = vunpack.c.l.b16 %v1136
  %v1265 = vunpack.c.l.b16 %v1137
  %v1266 = vunpack.c.l.b16 %v1138
  %v1267 = vunpack.c.l.b16 %v1139
  %v1268 = vunpack.c.l.b16 %v1140
  %v1269 = vunpack.c.l.b16 %v1141
  %v1270 = vunpack.c.l.b16 %v1142
  %v1271 = vunpack.c.l.b16 %v1143
  %v1272 = vunpack.c.l.b16 %v1144
  %v1273 = vunpack.c.l.b16 %v1145
  %v1274 = vunpack.c.l.b16 %v1146
  %v1275 = vunpack.c.l.b16 %v1147
  %v1276 = vunpack.c.l.b16 %v1148
  %v1277 = vunpack.c.l.b16 %v1149
  %v1278 = vunpack.c.l.b16 %v1150
  %v1279 = vunpack.c.l.b16 %v1151
  %v1280 = vunpack.c.l.b16 %v1152
  %v1281 = vunpack.c.l.b16 %v1153
  %v1282 = vunpack.c.l.b16 %v1154
  %v1283 = vunpack.c.l.b16 %v1155
  %v1284 = vunpack.c.l.b16 %v1156
  %v1285 = vunpack.c.l.b16 %v1157
  %v1286 = vunpack.c.l.b16 %v1158
  %v1287 = vunpack.c.l.b16 %v1159
  %v1288 = vunpack.c.l.b16 %v1160
  %v1289 = vunpack.c.l.b16 %v1161
  %v1290 = vunpack.c.l.b16 %v1162
  %v1291 = vunpack.c.l.b16 %v1163
  %v1292 = vunpack.c.l.b16 %v1164
  %v1293 = vunpack.c.l.b16 %v1165
  %v1294 = vunpack.c.l.b16 %v1166
  %v1295 = vunpack.c.l.b16 %v1167
  %v1296 = vunpack.c.l.b16 %v1168
  %v1297 = vunpack.c.l.b16 %v1169
  %v1298 = vunpack.c.l.b16 %v1170
  %v1299 = vunpack.c.l.b16 %v1171
  %v1300 = vunpack.c.l.b16 %v1172
  %v1301 = vunpack.c.l.b16 %v1173
  %v1302 = vunpack.c.l.b16 %v1174
  %v1303 = vunpack.c.l.b16 %v1175
  %v1304 = vunpack.c.l.b16 %v1176
  %v1305 = vunpack.c.l.b16 %v1177
  %v1306 = vunpack.c.l.b16 %v1178
  %v1307 = vunpack.c.l.b16 %v1179
  %v1308 = vunpack.c.l.b16 %v1180
  %v1309 = vunpack.c.l.b16 %v1181
  %v1310 = vpack.c.b16 %v1247, %v1246
  %v1311 = vpack.c.b16 %v1249, %v1248
  %v1312 = vpack.c.b16 %v1251, %v1250
  %v1313 = vpack.c.b16 %v1253, %v1252
  %v1314 = vpack.c.b16 %v1255, %v1254
  %v1315 = vpack.c.b16 %v1257, %v1256
  %v1316 = vpack.c.b16 %v1259, %v1258
  %v1317 = vpack.c.b16 %v1261, %v1260
  %v1318 = vpack.c.b16 %v1263, %v1262
  %v1319 = vpack.c.b16 %v1265, %v1264
  %v1320 = vpack.c.b16 %v1267, %v1266
  %v1321 = vpack.c.b16 %v1269, %v1268
  %v1322 = vpack.c.b16 %v1271, %v1270
  %v1323 = vpack.c.b16 %v1273, %v1272
  %v1324 = vpack.c.b16 %v1275, %v1274
  %v1325 = vpack.c.b16 %v1277, %v1276
  %v1326 = vpack.c.b16 %v1279, %v1278
  %v1327 = vpack.c.b16 %v1281, %v1280
  %v1328 = vpack.c.b16 %v1283, %v1282
  %v1329 = vpack.c.b16 %v1285, %v1284
  %v1330 = vpack.c.b16 %v1287, %v1286
  %v1331 = vpack.c.b16 %v1289, %v1288
  %v1332 = vpack.c.b16 %v1291, %v1290
  %v1333 = vpack.c.b16 %v1293, %v1292
  %v1334 = vpack.c.b16 %v1295, %v1294
  %v1335 = vpack.c.b16 %v1297, %v1296
  %v1336 = vpack.c.b16 %v1299, %v1298
  %v1337 = vpack.c.b16 %v1301, %v1300
  %v1338 = vpack.c.b16 %v1303, %v1302
  %v1339 = vpack.c.b16 %v1305, %v1304
  %v1340 = vpack.c.b16 %v1307, %v1306
  %v1341 = vpack.c.b16 %v1309, %v1308
  %1374 = vmatprep.subr.bf16.mxu0 0
  %1375 = vmatpush1.bf16.msra.mxu0 %v1310
  %1376 = vmatprep.subr.bf16.mxu0 0
  %1377 = vmatpush1.bf16.msra.mxu0 %v1311
  %1378 = vmatprep.subr.bf16.mxu0 0
  %1379 = vmatpush1.bf16.msra.mxu0 %v1312
  %1380 = vmatprep.subr.bf16.mxu0 0
  %1381 = vmatpush1.bf16.msra.mxu0 %v1313
  %1382 = vmatprep.subr.bf16.mxu0 0
  %1383 = vmatpush1.bf16.msra.mxu0 %v1314
  %1384 = vmatprep.subr.bf16.mxu0 0
  %1385 = vmatpush1.bf16.msra.mxu0 %v1315
  %1386 = vmatprep.subr.bf16.mxu0 0
  %1387 = vmatpush1.bf16.msra.mxu0 %v1316
  %1388 = vmatprep.subr.bf16.mxu0 0
  %1389 = vmatpush1.bf16.msra.mxu0 %v1317
  %1390 = vmatprep.subr.bf16.mxu0 0
  %1391 = vmatpush1.bf16.msra.mxu0 %v1318
  %1392 = vmatprep.subr.bf16.mxu0 0
  %1393 = vmatpush1.bf16.msra.mxu0 %v1319
  %1394 = vmatprep.subr.bf16.mxu0 0
  %1395 = vmatpush1.bf16.msra.mxu0 %v1320
  %1396 = vmatprep.subr.bf16.mxu0 0
  %1397 = vmatpush1.bf16.msra.mxu0 %v1321
  %1398 = vmatprep.subr.bf16.mxu0 0
  %1399 = vmatpush1.bf16.msra.mxu0 %v1322
  %1400 = vmatprep.subr.bf16.mxu0 0
  %1401 = vmatpush1.bf16.msra.mxu0 %v1323
  %1402 = vmatprep.subr.bf16.mxu0 0
  %1403 = vmatpush1.bf16.msra.mxu0 %v1324
  %1404 = vmatprep.subr.bf16.mxu0 0
  %1405 = vmatpush1.bf16.msra.mxu0 %v1325
  %1406 = vmatprep.mubr.bf16.mxu0 %v1115
  %1407 = vmatmul.mubr.bf16.gmra.mrb[0].mxu0 %v1114
  %v1408 = vpop.f32.mrb[0].mxu0
  %v1409 = vadd.f32 0.0, %v1408
  %v1410 = vpop.f32.mrb[0].mxu0
  %v1411 = vpop.f32.mrb[0].mxu0
  %v1412 = vpop.f32.mrb[0].mxu0
  %1413 = vdwg.mxu0
  %1414 = vmatprep.subr.bf16.mxu0 0
  %1415 = vmatpush1.bf16.msra.mxu0 %v1326
  %1416 = vmatprep.subr.bf16.mxu0 0
  %1417 = vmatpush1.bf16.msra.mxu0 %v1327
  %1418 = vmatprep.subr.bf16.mxu0 0
  %1419 = vmatpush1.bf16.msra.mxu0 %v1328
  %1420 = vmatprep.subr.bf16.mxu0 0
  %1421 = vmatpush1.bf16.msra.mxu0 %v1329
  %1422 = vmatprep.subr.bf16.mxu0 0
  %1423 = vmatpush1.bf16.msra.mxu0 %v1330
  %1424 = vmatprep.subr.bf16.mxu0 0
  %1425 = vmatpush1.bf16.msra.mxu0 %v1331
  %1426 = vmatprep.subr.bf16.mxu0 0
  %1427 = vmatpush1.bf16.msra.mxu0 %v1332
  %1428 = vmatprep.subr.bf16.mxu0 0
  %1429 = vmatpush1.bf16.msra.mxu0 %v1333
  %1430 = vmatprep.subr.bf16.mxu0 0
  %1431 = vmatpush1.bf16.msra.mxu0 %v1334
  %1432 = vmatprep.subr.bf16.mxu0 0
  %1433 = vmatpush1.bf16.msra.mxu0 %v1335
  %1434 = vmatprep.subr.bf16.mxu0 0
  %1435 = vmatpush1.bf16.msra.mxu0 %v1336
  %1436 = vmatprep.subr.bf16.mxu0 0
  %1437 = vmatpush1.bf16.msra.mxu0 %v1337
  %1438 = vmatprep.subr.bf16.mxu0 0
  %1439 = vmatpush1.bf16.msra.mxu0 %v1338
  %1440 = vmatprep.subr.bf16.mxu0 0
  %1441 = vmatpush1.bf16.msra.mxu0 %v1339
  %1442 = vmatprep.subr.bf16.mxu0 0
  %1443 = vmatpush1.bf16.msra.mxu0 %v1340
  %1444 = vmatprep.subr.bf16.mxu0 0
  %1445 = vmatpush1.bf16.msra.mxu0 %v1341
  %1446 = vmatprep.mubr.bf16.mxu0 %v1117
  %1447 = vmatmul.mubr.bf16.gmra.mrb[0].mxu0 %v1116
  %v1448 = vpop.f32.mrb[0].mxu0
  %v1449 = vadd.f32 %v1409, %v1448
  %v1450 = vpop.f32.mrb[0].mxu0
  %v1451 = vpop.f32.mrb[0].mxu0
  %v1452 = vpop.f32.mrb[0].mxu0
  %1453 = vdwg.mxu0
  %v1454 = vpack.c.bf16 %v1449, %v1449
  %v1455 = vld [vmem:[%s6] sm:$0xf]
  %v1456 = vld [vmem:[%s6 + $0x4] sm:$0xf]
  %v1457 = vld [vmem:[%s6 + $0x8] sm:$0xf]
  %v1458 = vld [vmem:[%s6 + $0xc] sm:$0xf]
  %v1459 = vld [vmem:[%s6 + $0x10] sm:$0xf]
  %v1460 = vld [vmem:[%s6 + $0x14] sm:$0xf]
  %v1461 = vld [vmem:[%s6 + $0x18] sm:$0xf]
  %v1462 = vld [vmem:[%s6 + $0x1c] sm:$0xf]
  %v1463 = vld [vmem:[%s7] sm:$0x1]
  %v1465 = vlaneseq
  %v1466 = vshrl.u32 %v1465, 7
  %v1467 = vsub.s32 0, %v1466
  %v1468 = vrot.slane %v1463, %v1467
  %v1478 = vunpack.c.l.b16 %v1455
  %v1479 = vunpack.c.l.b16 %v1456
  %v1480 = vunpack.c.l.b16 %v1457
  %v1481 = vunpack.c.l.b16 %v1458
  %v1482 = vunpack.c.l.b16 %v1459
  %v1483 = vunpack.c.l.b16 %v1460
  %v1484 = vunpack.c.l.b16 %v1461
  %v1485 = vunpack.c.l.b16 %v1462
  %v1486 = vpack.c.b16 %v1479, %v1478
  %v1487 = vpack.c.b16 %v1481, %v1480
  %v1488 = vpack.c.b16 %v1483, %v1482
  %v1489 = vpack.c.b16 %v1485, %v1484
  %vm1494 = vcmask 523264
  %v1496 = vsel %vm1494, %v1454, 0
  %1498 = vmatprep.subr.bf16.mxu0 0
  %1499 = vmatpush1.bf16.msra.mxu0 %v1486
  %1500 = vmatprep.subr.bf16.mxu0 0
  %1501 = vmatpush1.bf16.msra.mxu0 %v1487
  %1502 = vmatprep.subr.bf16.mxu0 0
  %1503 = vmatpush1.bf16.msra.mxu0 %v1488
  %1504 = vmatprep.subr.bf16.mxu0 0
  %1505 = vmatpush1.bf16.msra.mxu0 %v1489
  %1506 = vmatprep.subr.bf16.mxu0 0
  %1507 = vmatpush1.bf16.msra.mxu0 0
  %1508 = vmatprep.subr.bf16.mxu0 0
  %1509 = vmatpush1.bf16.msra.mxu0 0
  %1510 = vmatprep.subr.bf16.mxu0 0
  %1511 = vmatpush1.bf16.msra.mxu0 0
  %1512 = vmatprep.subr.bf16.mxu0 0
  %1513 = vmatpush1.bf16.msra.mxu0 0
  %1514 = vmatprep.subr.bf16.mxu0 0
  %1515 = vmatpush1.bf16.msra.mxu0 0
  %1516 = vmatprep.subr.bf16.mxu0 0
  %1517 = vmatpush1.bf16.msra.mxu0 0
  %1518 = vmatprep.subr.bf16.mxu0 0
  %1519 = vmatpush1.bf16.msra.mxu0 0
  %1520 = vmatprep.subr.bf16.mxu0 0
  %1521 = vmatpush1.bf16.msra.mxu0 0
  %1522 = vmatprep.subr.bf16.mxu0 0
  %1523 = vmatpush1.bf16.msra.mxu0 0
  %1524 = vmatprep.subr.bf16.mxu0 0
  %1525 = vmatpush1.bf16.msra.mxu0 0
  %1526 = vmatprep.subr.bf16.mxu0 0
  %1527 = vmatpush1.bf16.msra.mxu0 0
  %1528 = vmatprep.subr.bf16.mxu0 0
  %1529 = vmatpush1.bf16.msra.mxu0 0
  %1530 = vmatprep.mubr.bf16.mxu0 0
  %1531 = vmatmul.mubr.bf16.gmra.mrb[0].mxu0 %v1496
  %v1532 = vpop.f32.mrb[0].mxu0
  %v1533 = vadd.f32 %v1468, %v1532
  %v1534 = vpop.f32.mrb[0].mxu0
  %v1535 = vpop.f32.mrb[0].mxu0
  %v1536 = vpop.f32.mrb[0].mxu0
  %1537 = vdwg.mxu0
  %1538 = vst [vmem:[%s8] sm:$0x3] %v1533
  // Predicated region
  $region34: #{forward.1} parent=0 // pred_check
    _
  $region35: #{forward.1} parent=0 // pred_check_branch
    %1540 = sbr.rel (0) target = $region37
  $region36: #{forward.1} parent=0 // pred_region
    _
  $region37: #{forward.1} parent=0 // pred_fallthru
    _
  // Predicated region
  $region38: #{forward.1} parent=0 // pred_check
    _
  $region39: #{forward.1} parent=0 // pred_check_branch
    %1542 = sbr.rel (0) target = $region41
  $region40: #{forward.1} parent=0 // pred_region
    _
  $region41: #{forward.1} parent=0 // pred_fallthru
    _

</llo_original>
